<compile_context>
chip_gen: v5e
topology: v5e:2x2
jax: 0.10.0
libtpu: 0.0.40
codegen_flags: <defaults>
</compile_context>

<pallas_src>
import jax
import jax.numpy as jnp
from jax.experimental import pallas as pl
from jax.experimental.pallas import tpu as pltpu


_LANE = 128


def _round_up(x, m):
    return (x + m - 1) // m * m


def _accumulate_encode(x_ref, w_ref, acc_ref):
    """acc += x_tile @ w_tile  (bf16 inputs, f32 MXU accumulation)."""
    @pl.when(pl.program_id(1) == 0)
    def _():
        acc_ref[...] = jnp.zeros_like(acc_ref)

    acc_ref[...] += jnp.dot(x_ref[...], w_ref[...],
                            preferred_element_type=jnp.float32)


def _finalize_feats(acc_ref, b_ref):
    """bias add + L2 normalization of the accumulated image features."""
    feats = acc_ref[...] + b_ref[...].astype(jnp.float32)
    inv_norm = jax.lax.rsqrt(jnp.sum(feats * feats, axis=-1, keepdims=True))
    return feats * inv_norm


def _train_kernel(x_ref, w_ref, b_ref, t_ref, logits_ref, acc_ref):
    """K-tiled image encode; on the last k step: normalize + scaled cosine logits.

    t_ref holds text embeddings that are already L2-normalized and pre-scaled
    by logit_scale (hoisted to the wrapper), zero-padded to a lane-dense width.
    """
    _accumulate_encode(x_ref, w_ref, acc_ref)

    @pl.when(pl.program_id(1) == pl.num_programs(1) - 1)
    def _():
        feats_n = _finalize_feats(acc_ref, b_ref)                      # (TB, Ep)
        t = t_ref[...].astype(jnp.float32)                             # (Cp, Ep)
        logits_ref[...] = jnp.dot(
            feats_n, t.T, preferred_element_type=jnp.float32
        ).astype(logits_ref.dtype)


def _eval_kernel(x_ref, w_ref, b_ref, feats_ref, acc_ref):
    """K-tiled image encode; on the last k step: write normalized features."""
    _accumulate_encode(x_ref, w_ref, acc_ref)

    @pl.when(pl.program_id(1) == pl.num_programs(1) - 1)
    def _():
        feats_ref[...] = _finalize_feats(acc_ref, b_ref).astype(feats_ref.dtype)


def lasted_wloss_forward(image_input, w_img, b_img, text_feats, logit_scale,
                         is_train=True, *, block_b=16, block_k=256,
                         stream_dtype=jnp.bfloat16):
    """Forward pass equivalent to LASTEDWLoss.forward.

    image_input : (B, C, H, W) float32  (NCHW, PyTorch convention)
    w_img       : (D, E)  image projection weight,  D = C*H*W
    b_img       : (E,)    image projection bias
    text_feats  : (num_class, E)  text-prompt embeddings
    Returns (None, logits_per_image) if is_train else (None, normalized feats).
    """
    B = image_input.shape[0]
    x = image_input.reshape(B, -1)
    D, E = w_img.shape
    C = text_feats.shape[0]

    # Lane/sublane-friendly padded sizes.
    Bp = _round_up(max(B, 1), block_b)
    Dp = _round_up(D, block_k)
    Ep = _round_up(E, _LANE)
    Cp = _round_up(C, _LANE)

    # bf16 streaming of activation + weight (f32 accumulation in-kernel).
    # Zero-padding D/E columns/rows does not change the matmul, the L2 norm,
    # or the cosine logits.
    xp = jnp.zeros((Bp, Dp), stream_dtype).at[:B, :D].set(x.astype(stream_dtype))
    wp = jnp.zeros((Dp, Ep), stream_dtype).at[:D, :E].set(w_img.astype(stream_dtype))
    bp = jnp.zeros((1, Ep), jnp.float32).at[0, :E].set(b_img.astype(jnp.float32))

    grid = (Bp // block_b, Dp // block_k)

    x_spec = pl.BlockSpec((block_b, block_k), lambda i, k: (i, k))
    # Double-buffered weight stream (the dominant HBM traffic).
    w_spec = pl.BlockSpec((block_k, Ep), lambda i, k: (k, 0),
                          pipeline_mode=pl.Buffered(2))
    b_spec = pl.BlockSpec((1, Ep), lambda i, k: (0, 0))

    compiler_params = pltpu.CompilerParams(
        dimension_semantics=("parallel", "arbitrary"),
        vmem_limit_bytes=32 * 1024 * 1024,
    )
    scratch = [pltpu.VMEM((block_b, Ep), jnp.float32)]

    if is_train:
        # Hoist (constant) text normalization out of the kernel and fold the
        # logit_scale into the normalized text embeddings.  logit_scale stays a
        # runtime value (not baked into the kernel).
        t = text_feats.astype(jnp.float32)
        t_n = t / jnp.linalg.norm(t, axis=1, keepdims=True)
        t_scaled = jnp.float32(logit_scale) * t_n
        tp = jnp.zeros((Cp, Ep), jnp.float32).at[:C, :E].set(t_scaled)

        logits_p = pl.pallas_call(
            _train_kernel,
            out_shape=jax.ShapeDtypeStruct((Bp, Cp), jnp.float32),
            grid_spec=pltpu.PrefetchScalarGridSpec(
                num_scalar_prefetch=0,
                grid=grid,
                in_specs=[x_spec, w_spec, b_spec,
                          pl.BlockSpec((Cp, Ep), lambda i, k: (0, 0))],
                out_specs=pl.BlockSpec((block_b, Cp), lambda i, k: (i, 0)),
                scratch_shapes=scratch,
            ),
            compiler_params=compiler_params,
        )(xp, wp, bp, tp)
        return None, logits_p[:B, :C]

    feats_p = pl.pallas_call(
        _eval_kernel,
        out_shape=jax.ShapeDtypeStruct((Bp, Ep), jnp.float32),
        grid_spec=pltpu.PrefetchScalarGridSpec(
            num_scalar_prefetch=0,
            grid=grid,
            in_specs=[x_spec, w_spec, b_spec],
            out_specs=pl.BlockSpec((block_b, Ep), lambda i, k: (i, 0)),
            scratch_shapes=scratch,
        ),
        compiler_params=compiler_params,
    )(xp, wp, bp)
    return None, feats_p[:B, :E]


def _reference(image_input, w_img, b_img, text_feats, logit_scale,
               stream_dtype=jnp.bfloat16):
    """Pure-JAX reference with the same bf16 streaming of x/w, for checking."""
    B = image_input.shape[0]
    x = image_input.reshape(B, -1).astype(stream_dtype).astype(jnp.float32)
    w = w_img.astype(stream_dtype).astype(jnp.float32)
    feats = jnp.dot(x, w, precision=jax.lax.Precision.HIGHEST) + b_img[None, :]
    feats_n = feats / jnp.linalg.norm(feats, axis=1, keepdims=True)
    t = text_feats.astype(jnp.float32)
    t_n = t / jnp.linalg.norm(t, axis=1, keepdims=True)
    logits = logit_scale * jnp.dot(feats_n, t_n.T,
                                   precision=jax.lax.Precision.HIGHEST)
    return logits, feats_n


if __name__ == "__main__":
    # Small deterministic shapes: batch=2, RGB 16x16 images, embed_dim=64,
    # num_class=4 (the four fixed CLIP text prompts).
    B, Cin, H, W = 2, 3, 16, 16
    E = 64
    NUM_CLASS = 4
    D = Cin * H * W   # 768 -> 3 K-tiles of 256

    key = jax.random.PRNGKey(0)
    k_x, k_w, k_b, k_t = jax.random.split(key, 4)

    image_input = jax.random.normal(k_x, (B, Cin, H, W), dtype=jnp.float32)
    w_img = jax.random.normal(k_w, (D, E), dtype=jnp.float32) * 0.02
    b_img = jax.random.normal(k_b, (E,), dtype=jnp.float32) * 0.02
    text_feats = jax.random.normal(k_t, (NUM_CLASS, E), dtype=jnp.float32)
    # CLIP logit_scale = exp(ln(1/0.07))
    logit_scale = 1.0 / 0.07

    # isTrain=True path: (None, logits_per_image)
    _, logits = lasted_wloss_forward(image_input, w_img, b_img, text_feats,
                                     logit_scale, is_train=True)
    # isTrain=False path: (None, normalized image features)
    _, feats = lasted_wloss_forward(image_input, w_img, b_img, text_feats,
                                    logit_scale, is_train=False)
    jax.block_until_ready((logits, feats))

    ref_logits, ref_feats = _reference(image_input, w_img, b_img, text_feats,
                                       logit_scale)

    assert logits.shape == (B, NUM_CLASS)
    assert feats.shape == (B, E)
    assert jnp.allclose(logits, ref_logits, atol=1e-2, rtol=1e-2)
    assert jnp.allclose(feats, ref_feats, atol=1e-3, rtol=1e-3)

    print("KERNEL_OK")
</pallas_src>

<mosaic_0001>
module attributes {stable_mosaic.version = 11 : i64} {
  func.func @_train_kernel(%arg0: i32, %arg1: i32, %arg2: memref<16x256xbf16, #tpu.memory_space<vmem>>, %arg3: memref<256x128xbf16, #tpu.memory_space<vmem>>, %arg4: memref<1x128xf32, #tpu.memory_space<vmem>>, %arg5: memref<128x128xf32, #tpu.memory_space<vmem>>, %arg6: memref<16x128xf32, #tpu.memory_space<vmem>>, %arg7: memref<16x128xf32, #tpu.memory_space<vmem>>) attributes {dimension_semantics = [#tpu.dimension_semantics<parallel>, #tpu.dimension_semantics<arbitrary>], iteration_bounds = array<i64: 1, 3>, scalar_prefetch = 0 : i64, scratch_operands = 1 : i64, tpu.core_type = #tpu.core_type<tc>, window_params = [{transform_indices = @transform_0, window_bounds = array<i64: 16, 256>}, {pipeline_mode = #tpu.pipeline_mode<double_buffered>, transform_indices = @transform_1, window_bounds = array<i64: 256, 128>}, {pipeline_mode = #tpu.pipeline_mode<synchronous>, transform_indices = @transform_2, window_bounds = array<i64: 1, 128>}, {pipeline_mode = #tpu.pipeline_mode<synchronous>, transform_indices = @transform_3, window_bounds = array<i64: 128, 128>}, {transform_indices = @transform_4, window_bounds = array<i64: 16, 128>}]} {
    %c0_i32 = arith.constant 0 : i32
    %0 = arith.cmpi eq, %arg1, %c0_i32 : i32
    %1 = arith.extui %0 : i1 to i32
    %c0_i32_0 = arith.constant 0 : i32
    %2 = arith.cmpi ne, %1, %c0_i32_0 : i32
    scf.if %2 {
      %cst_9 = arith.constant 0.000000e+00 : f32
      %12 = vector.broadcast %cst_9 : f32 to vector<16x128xf32>
      %c0_10 = arith.constant 0 : index
      %c0_11 = arith.constant 0 : index
      %13 = vector.load %arg7[%c0_10, %c0_11] : memref<16x128xf32, #tpu.memory_space<vmem>>, vector<16x128xf32>
      tpu.vector_store %arg7[%c0_10, %c0_11], %12 {strides = array<i32>} : memref<16x128xf32, #tpu.memory_space<vmem>>, vector<16x128xf32>,
    } else {
    }
    %c0 = arith.constant 0 : index
    %c0_1 = arith.constant 0 : index
    %3 = vector.load %arg7[%c0, %c0_1] : memref<16x128xf32, #tpu.memory_space<vmem>>, vector<16x128xf32>
    %c0_2 = arith.constant 0 : index
    %c0_3 = arith.constant 0 : index
    %4 = vector.load %arg2[%c0_2, %c0_3] : memref<16x256xbf16, #tpu.memory_space<vmem>>, vector<16x256xbf16>
    %c0_4 = arith.constant 0 : index
    %c0_5 = arith.constant 0 : index
    %5 = vector.load %arg3[%c0_4, %c0_5] : memref<256x128xbf16, #tpu.memory_space<vmem>>, vector<256x128xbf16>
    %cst = arith.constant dense<0.000000e+00> : vector<16x128xf32>
    %6 = tpu.matmul %4, %5, %cst {dimension_numbers = #tpu.dot_dimension_numbers<[1], [0], [0], [1], [0, 0, 1, 1], [], []>} : vector<16x256xbf16>, vector<256x128xbf16>, vector<16x128xf32> -> vector<16x128xf32>
    %7 = arith.addf %3, %6 : vector<16x128xf32>
    %c0_6 = arith.constant 0 : index
    %c0_7 = arith.constant 0 : index
    %8 = vector.load %arg7[%c0_6, %c0_7] : memref<16x128xf32, #tpu.memory_space<vmem>>, vector<16x128xf32>
    tpu.vector_store %arg7[%c0_6, %c0_7], %7 {strides = array<i32>} : memref<16x128xf32, #tpu.memory_space<vmem>>, vector<16x128xf32>,
    %c2_i32 = arith.constant 2 : i32
    %9 = arith.cmpi eq, %arg1, %c2_i32 : i32
    %10 = arith.extui %9 : i1 to i32
    %c0_i32_8 = arith.constant 0 : i32
    %11 = arith.cmpi ne, %10, %c0_i32_8 : i32
    scf.if %11 {
      %c0_9 = arith.constant 0 : index
      %c0_10 = arith.constant 0 : index
      %12 = vector.load %arg7[%c0_9, %c0_10] : memref<16x128xf32, #tpu.memory_space<vmem>>, vector<16x128xf32>
      %c0_11 = arith.constant 0 : index
      %c0_12 = arith.constant 0 : index
      %13 = vector.load %arg4[%c0_11, %c0_12] : memref<1x128xf32, #tpu.memory_space<vmem>>, vector<1x128xf32>
      %14 = vector.broadcast %13 : vector<1x128xf32> to vector<16x128xf32>
      %15 = arith.addf %12, %14 : vector<16x128xf32>
      %16 = arith.mulf %15, %15 : vector<16x128xf32>
      %cst_13 = arith.constant dense<0.000000e+00> : vector<16xf32>
      %17 = vector.multi_reduction <add>, %16, %cst_13 [1] : vector<16x128xf32> to vector<16xf32>
      %18 = vector.shape_cast %17 : vector<16xf32> to vector<16x1xf32>
      %19 = math.rsqrt %18 : vector<16x1xf32>
      %20 = vector.broadcast %19 : vector<16x1xf32> to vector<16x128xf32>
      %21 = arith.mulf %15, %20 : vector<16x128xf32>
      %c0_14 = arith.constant 0 : index
      %c0_15 = arith.constant 0 : index
      %22 = vector.load %arg5[%c0_14, %c0_15] : memref<128x128xf32, #tpu.memory_space<vmem>>, vector<128x128xf32>
      %23 = tpu.transpose %22, [1, 0] : vector<128x128xf32> -> vector<128x128xf32>
      %cst_16 = arith.constant dense<0.000000e+00> : vector<16x128xf32>
      %24 = tpu.matmul %21, %23, %cst_16 {dimension_numbers = #tpu.dot_dimension_numbers<[1], [0], [0], [1], [0, 0, 1, 1], [], []>} : vector<16x128xf32>, vector<128x128xf32>, vector<16x128xf32> -> vector<16x128xf32>
      %c0_17 = arith.constant 0 : index
      %c0_18 = arith.constant 0 : index
      %25 = vector.load %arg6[%c0_17, %c0_18] : memref<16x128xf32, #tpu.memory_space<vmem>>, vector<16x128xf32>
      tpu.vector_store %arg6[%c0_17, %c0_18], %24 {strides = array<i32>} : memref<16x128xf32, #tpu.memory_space<vmem>>, vector<16x128xf32>,
    } else {
    }
    return
  }
  func.func @transform_0(%arg0: i32, %arg1: i32) -> (i32, i32) {
    %c0_i32 = arith.constant 0 : i32
    return %arg0, %arg1 : i32, i32
  }
  func.func @transform_1(%arg0: i32, %arg1: i32) -> (i32, i32) {
    %c0_i32 = arith.constant 0 : i32
    %c0_i32_0 = arith.constant 0 : i32
    return %arg1, %c0_i32 : i32, i32
  }
  func.func @transform_2(%arg0: i32, %arg1: i32) -> (i32, i32) {
    %c0_i32 = arith.constant 0 : i32
    %c0_i32_0 = arith.constant 0 : i32
    %c0_i32_1 = arith.constant 0 : i32
    return %c0_i32, %c0_i32_0 : i32, i32
  }
  func.func @transform_3(%arg0: i32, %arg1: i32) -> (i32, i32) {
    %c0_i32 = arith.constant 0 : i32
    %c0_i32_0 = arith.constant 0 : i32
    %c0_i32_1 = arith.constant 0 : i32
    return %c0_i32, %c0_i32_0 : i32, i32
  }
  func.func @transform_4(%arg0: i32, %arg1: i32) -> (i32, i32) {
    %c0_i32 = arith.constant 0 : i32
    %c0_i32_0 = arith.constant 0 : i32
    return %arg0, %c0_i32 : i32, i32
  }
}

</mosaic_0001>

<llo_original>
// kernel: tpu_custom_call.1
$region0: #{tpu_custom_call.1}
  #allocation0 [shape = 'u32[]', space=smem, size = 0x4, offset = 0x4, fixed_abs, tag = 'smem constant byte address 0x4 - core index']
  #allocation1 [shape = 'u32[72,128]{1,0:T(1,128)}', space=vmem, size = 0x9000, scoped, tag = 'internal scratch']
  #allocation2 [shape = 'f32[16,128]{1,0:T(8,128)}', space=vmem, size = 0x2000, scoped, tag = 'scratch operand']
  %s0 = inlined_call_operand.hbm [shape: bf16[16,768], index: 0, kind: input, shape index: {}]
  %s1 = inlined_call_operand.hbm [shape: bf16[768,128], index: 1, kind: input, shape index: {}]
  %s2 = inlined_call_operand.vmem [shape: f32[1,128], index: 2, kind: input, shape index: {}]
  %s3 = inlined_call_operand.hbm [shape: f32[128,128], index: 3, kind: input, shape index: {}]
  %s4 = inlined_call_operand.hbm [shape: f32[16,128], index: 4, kind: output, shape index: {}]
  %s5 = sld [smem:[#allocation0]]
  $region69: #{tpu_custom_call.1} parent=0
    _
  %s7 = ssub.s32 1, %s5
  %s8 = scalar_select 0, %s7, %s5
  $region1: #{tpu_custom_call.1} parent=0
    #allocation3 [shape = 'u8[16384]{0}', space=vmem, size = 0x4000, scoped, tag = 'input window, operand 0']
    #allocation4 [shape = 's32[2]{0}', space=sflag, size = 0x8, scoped, tag = 'scoped memory for tpu_custom_call.1']
    #allocation5 [shape = 's32[2]{0}', space=sflag, size = 0x8, scoped, tag = 'scoped memory for tpu_custom_call.1']
    #allocation6 [shape = 'u8[131072]{0}', space=vmem, size = 0x20000, scoped, tag = 'input window, operand 1']
    #allocation7 [shape = 's32[2]{0}', space=sflag, size = 0x8, scoped, tag = 'scoped memory for tpu_custom_call.1']
    #allocation8 [shape = 'u8[65536]{0}', space=vmem, size = 0x10000, scoped, tag = 'input window, operand 3, single buffered']
    #allocation9 [shape = 'u8[8192]{0}', space=vmem, size = 0x2000, scoped, tag = 'output window, operand 0, single buffered']
    %9 = vsyncpa [#allocation4], 0
    %s10 = scalar_lea.sflag [#allocation4], 1
    %11 = vsyncpa %s10, 0
    %12 = vsyncpa [#allocation7], 0
    %s13 = scalar_lea.sflag [#allocation7], 1
    %14 = vsyncpa %s13, 0
    %15 = vsyncpa [#allocation5], 0
    loop: start=0, step=1, limit=5
    $region2: #{tpu_custom_call.1} parent=1 // loop_pre_header
      _
    $region3: #{tpu_custom_call.1} parent=1 // loop_header
      %s17 = sphi 0, %s21
      %p18 = scmp.ge.s32.totalorder %s17, 5
      %s24 = sphi 0, %s36
      %s25 = sphi 0, %s32
      %s26 = sphi 0, %s24
      %s27 = sphi 0, %s25
      %s28 = sphi 0, %s26
      %s29 = sphi 0, %s27
      %s41 = sphi 0, %s43
      %s44 = sphi 0, %s41
      %s45 = sphi 0, %s44
      %s61 = sphi 0, %s45
      %s67 = sphi 0, %s69
      %s70 = sphi 0, %s67
      %s71 = sphi 0, %s70
      %s87 = sphi 0, %s71
      %s91 = sphi 0, %s91
      %s93 = sphi 0, %s91
      %s94 = sphi 0, %s93
      %s108 = sphi 0, %s94
      %s112 = sphi 0, %s112
      %s114 = sphi 0, %s112
      %s115 = sphi 0, %s114
      %s129 = sphi 0, %s115
      %s135 = sphi 0, %s137
      %s138 = sphi 0, %s135
      %s139 = sphi 0, %s138
      %s155 = sphi 0, %s139
    $region4: #{tpu_custom_call.1} parent=1 // loop_header_branch
      %20 = sbr.rel (%p18) target = $region8
    $region5: #{tpu_custom_call.1} parent=1 // loop_body
      %s22 = ssub.s32 %s17, 1
      %s23 = ssub.s32 %s17, 2
      %s30 = sadd.s32 1, %s25
      %p31 = scmp.ge.s32.totalorder %s30, 3
      %s32 = scalar_select %p31, 0, %s30
      %s33 = sadd.s32 1, %s24
      %s34 = scalar_select %p31, %s33, %s24
      %p35 = scmp.ge.s32.totalorder %s34, 1
      %s36 = scalar_select %p35, 0, %s34
      %s37 = ssub.s32 %s24, %s36
      %s38 = ssub.s32 %s25, %s32
      %s39 = sor.u32 %s37, %s38
      %p40 = scmp.eq.s32.totalorder %s39, 0
      %s42 = sadd.s32 %s41, 1
      %s43 = scalar_select %p40, %s41, %s42
      %p46 = pneg %p40
      %p47 = scmp.eq.s32.totalorder %s17, 2
      %p48 = por %p46, %p47
      %p49 = scmp.ne.s32.totalorder %s41, %s44
      %p50 = scmp.eq.s32.totalorder %s17, 0
      %p51 = por %p49, %p50
      %p52 = scmp.ne.s32.totalorder %s41, %s44
      %p53 = scmp.eq.s32.totalorder %s22, 2
      %p54 = por %p52, %p53
      %p55 = scmp.ne.s32.totalorder %s44, %s45
      %p56 = scmp.eq.s32.totalorder %s22, 0
      %p57 = por %p55, %p56
      %p58 = scmp.ne.s32.totalorder %s44, %s45
      %p59 = scmp.eq.s32.totalorder %s23, 2
      %p60 = por %p58, %p59
      %p62 = scmp.ne.s32.totalorder %s45, %s61
      %p63 = scmp.eq.s32.totalorder %s23, 0
      %p64 = por %p62, %p63
      %s65 = ssub.s32 %s25, %s32
      %p66 = scmp.eq.s32.totalorder %s65, 0
      %s68 = sadd.s32 %s67, 1
      %s69 = scalar_select %p66, %s67, %s68
      %p72 = pneg %p66
      %p73 = scmp.eq.s32.totalorder %s17, 2
      %p74 = por %p72, %p73
      %p75 = scmp.ne.s32.totalorder %s67, %s70
      %p76 = scmp.eq.s32.totalorder %s17, 0
      %p77 = por %p75, %p76
      %p78 = scmp.ne.s32.totalorder %s67, %s70
      %p79 = scmp.eq.s32.totalorder %s22, 2
      %p80 = por %p78, %p79
      %p81 = scmp.ne.s32.totalorder %s70, %s71
      %p82 = scmp.eq.s32.totalorder %s22, 0
      %p83 = por %p81, %p82
      %p84 = scmp.ne.s32.totalorder %s70, %s71
      %p85 = scmp.eq.s32.totalorder %s23, 2
      %p86 = por %p84, %p85
      %p88 = scmp.ne.s32.totalorder %s71, %s87
      %p89 = scmp.eq.s32.totalorder %s23, 0
      %p90 = por %p88, %p89
      %s92 = sadd.s32 %s91, 1
      %p95 = scmp.eq.s32.totalorder %s17, 2
      %p96 = scmp.ne.s32.totalorder %s91, %s93
      %p97 = scmp.eq.s32.totalorder %s17, 0
      %p98 = por %p96, %p97
      %p99 = scmp.ne.s32.totalorder %s91, %s93
      %p100 = scmp.eq.s32.totalorder %s22, 2
      %p101 = por %p99, %p100
      %p102 = scmp.ne.s32.totalorder %s93, %s94
      %p103 = scmp.eq.s32.totalorder %s22, 0
      %p104 = por %p102, %p103
      %p105 = scmp.ne.s32.totalorder %s93, %s94
      %p106 = scmp.eq.s32.totalorder %s23, 2
      %p107 = por %p105, %p106
      %p109 = scmp.ne.s32.totalorder %s94, %s108
      %p110 = scmp.eq.s32.totalorder %s23, 0
      %p111 = por %p109, %p110
      %s113 = sadd.s32 %s112, 1
      %p116 = scmp.eq.s32.totalorder %s17, 2
      %p117 = scmp.ne.s32.totalorder %s112, %s114
      %p118 = scmp.eq.s32.totalorder %s17, 0
      %p119 = por %p117, %p118
      %p120 = scmp.ne.s32.totalorder %s112, %s114
      %p121 = scmp.eq.s32.totalorder %s22, 2
      %p122 = por %p120, %p121
      %p123 = scmp.ne.s32.totalorder %s114, %s115
      %p124 = scmp.eq.s32.totalorder %s22, 0
      %p125 = por %p123, %p124
      %p126 = scmp.ne.s32.totalorder %s114, %s115
      %p127 = scmp.eq.s32.totalorder %s23, 2
      %p128 = por %p126, %p127
      %p130 = scmp.ne.s32.totalorder %s115, %s129
      %p131 = scmp.eq.s32.totalorder %s23, 0
      %p132 = por %p130, %p131
      %s133 = ssub.s32 %s24, %s36
      %p134 = scmp.eq.s32.totalorder %s133, 0
      %s136 = sadd.s32 %s135, 1
      %s137 = scalar_select %p134, %s135, %s136
      %p140 = pneg %p134
      %p141 = scmp.eq.s32.totalorder %s17, 2
      %p142 = por %p140, %p141
      %p143 = scmp.ne.s32.totalorder %s135, %s138
      %p144 = scmp.eq.s32.totalorder %s17, 0
      %p145 = por %p143, %p144
      %p146 = scmp.ne.s32.totalorder %s135, %s138
      %p147 = scmp.eq.s32.totalorder %s22, 2
      %p148 = por %p146, %p147
      %p149 = scmp.ne.s32.totalorder %s138, %s139
      %p150 = scmp.eq.s32.totalorder %s22, 0
      %p151 = por %p149, %p150
      %p152 = scmp.ne.s32.totalorder %s138, %s139
      %p153 = scmp.eq.s32.totalorder %s23, 2
      %p154 = por %p152, %p153
      %p156 = scmp.ne.s32.totalorder %s139, %s155
      %p157 = scmp.eq.s32.totalorder %s23, 0
      %p158 = por %p156, %p157
      %p159 = scmp.le.s32.totalorder 1, %s17
      %p160 = scmp.lt.s32.totalorder %s17, 4
      %p161 = pnand %p159, %p160
      %p162 = pneg %p161
      // Predicated region
      $region9: #{tpu_custom_call.1} parent=5 // pred_check
        _
      $region10: #{tpu_custom_call.1} parent=5 // pred_check_branch
        %164 = sbr.rel (%p161) target = $region12
      $region11: #{tpu_custom_call.1} parent=5 // pred_region
        %s165 = ssub.s32 %s17, 1
        // Predicated region
        $region13: #{tpu_custom_call.1} parent=11 // pred_check
          %p166 = pneg %p104
        $region14: #{tpu_custom_call.1} parent=11 // pred_check_branch
          %168 = sbr.rel (%p166) target = $region16
        $region15: #{tpu_custom_call.1} parent=11 // pred_region
          _
        $region16: #{tpu_custom_call.1} parent=11 // pred_fallthru
          _
        // Predicated region
        $region17: #{tpu_custom_call.1} parent=11 // pred_check
          %p169 = pneg %p125
        $region18: #{tpu_custom_call.1} parent=11 // pred_check_branch
          %171 = sbr.rel (%p169) target = $region20
        $region19: #{tpu_custom_call.1} parent=11 // pred_region
          %173 = vsyncadd [#allocation7], 0
          %s174 = sshll.u32 %s3, 4
          %s175 = int_to_ptr.hbm [resolvable:$true] %s174
          %s176 = sshll.u32 [#allocation8], 4
          %s177 = int_to_ptr.vmem [resolvable:$true] %s176
          %182 = dma.hbm_to_vmem [thread:$0]  %s175, 2048, %s177, [#allocation7], 128, 128, 8
        $region20: #{tpu_custom_call.1} parent=11 // pred_fallthru
          _
      $region12: #{tpu_custom_call.1} parent=5 // pred_fallthru
        _
      %p183 = scmp.lt.s32.totalorder %s17, 3
      // Predicated region
      $region21: #{tpu_custom_call.1} parent=5 // pred_check
        %p184 = pneg %p183
      $region22: #{tpu_custom_call.1} parent=5 // pred_check_branch
        %186 = sbr.rel (%p184) target = $region24
      $region23: #{tpu_custom_call.1} parent=5 // pred_region
        // Predicated region
        $region25: #{tpu_custom_call.1} parent=23 // pred_check
          %p187 = pneg %p51
        $region26: #{tpu_custom_call.1} parent=23 // pred_check_branch
          %189 = sbr.rel (%p187) target = $region28
        $region27: #{tpu_custom_call.1} parent=23 // pred_region
          %s190 = sand.u32 %s41, 1
          %s191 = scalar_lea.sflag [#allocation4], %s190
          %s192 = sand.u32 %s41, 1
          %s193 = smul.addr %s192, 16
          %s194 = scalar_lea.vmem [#allocation3], %s193
          %s195 = smul.u32 2, %s24
          %s196 = smul.u32 2, %s25
          %198 = vsyncadd %s191, 0
          %s199 = smul.addr %s195, 6
          %s200 = sadd.s32 %s196, %s199
          %s201 = smul.addr %s200, 4
          %s202 = scalar_lea.hbm %s0, %s201
          %s203 = sshll.u32 %s202, 4
          %s204 = int_to_ptr.hbm [resolvable:$true] %s203
          %s205 = sshll.u32 %s194, 4
          %s206 = int_to_ptr.vmem [resolvable:$true] %s205
          %211 = dma.hbm_to_vmem [thread:$0]  %s204, 256, %s206, %s191, 384, 128, 8
        $region28: #{tpu_custom_call.1} parent=23 // pred_fallthru
          _
        // Predicated region
        $region29: #{tpu_custom_call.1} parent=23 // pred_check
          %p212 = pneg %p77
        $region30: #{tpu_custom_call.1} parent=23 // pred_check_branch
          %214 = sbr.rel (%p212) target = $region32
        $region31: #{tpu_custom_call.1} parent=23 // pred_region
          %s215 = sand.u32 %s17, 1
          %s216 = scalar_lea.sflag [#allocation7], %s215
          %s217 = sand.u32 %s67, 1
          %s218 = smul.addr %s217, 128
          %s219 = scalar_lea.vmem [#allocation6], %s218
          %s220 = smul.u32 32, %s25
          %222 = vsyncadd %s216, 0
          %s223 = smul.addr %s220, 4
          %s224 = scalar_lea.hbm %s1, %s223
          %s225 = sshll.u32 %s224, 4
          %s226 = int_to_ptr.hbm [resolvable:$true] %s225
          %s227 = sshll.u32 %s219, 4
          %s228 = int_to_ptr.vmem [resolvable:$true] %s227
          %233 = dma.hbm_to_vmem [thread:$0]  %s226, 2048, %s228, %s216, 64, 64, 4
        $region32: #{tpu_custom_call.1} parent=23 // pred_fallthru
          _
      $region24: #{tpu_custom_call.1} parent=5 // pred_fallthru
        _
      %p234 = scmp.le.s32.totalorder 1, %s17
      %p235 = scmp.lt.s32.totalorder %s17, 4
      %p236 = pnand %p234, %p235
      %p237 = pneg %p236
      // Predicated region
      $region33: #{tpu_custom_call.1} parent=5 // pred_check
        _
      $region34: #{tpu_custom_call.1} parent=5 // pred_check_branch
        %239 = sbr.rel (%p236) target = $region36
      $region35: #{tpu_custom_call.1} parent=5 // pred_region
        %s240 = ssub.s32 %s17, 1
        %s241 = sand.u32 %s44, 1
        %s242 = scalar_lea.sflag [#allocation4], %s241
        %s243 = sand.u32 %s44, 1
        %s244 = smul.addr %s243, 16
        %s245 = scalar_lea.vmem [#allocation3], %s244
        // Predicated region
        $region37: #{tpu_custom_call.1} parent=35 // pred_check
          %p246 = pneg %p57
        $region38: #{tpu_custom_call.1} parent=35 // pred_check_branch
          %248 = sbr.rel (%p246) target = $region40
        $region39: #{tpu_custom_call.1} parent=35 // pred_region
          %250 = dma.done %s242, 256
        $region40: #{tpu_custom_call.1} parent=35 // pred_fallthru
          _
        %s251 = sand.u32 %s22, 1
        %s252 = scalar_lea.sflag [#allocation7], %s251
        %s253 = sand.u32 %s70, 1
        %s254 = smul.addr %s253, 128
        %s255 = scalar_lea.vmem [#allocation6], %s254
        // Predicated region
        $region41: #{tpu_custom_call.1} parent=35 // pred_check
          %p256 = pneg %p83
        $region42: #{tpu_custom_call.1} parent=35 // pred_check_branch
          %258 = sbr.rel (%p256) target = $region44
        $region43: #{tpu_custom_call.1} parent=35 // pred_region
          %260 = dma.done %s252, 2048
        $region44: #{tpu_custom_call.1} parent=35 // pred_fallthru
          _
        // Predicated region
        $region45: #{tpu_custom_call.1} parent=35 // pred_check
          %p261 = pneg %p125
        $region46: #{tpu_custom_call.1} parent=35 // pred_check_branch
          %263 = sbr.rel (%p261) target = $region48
        $region47: #{tpu_custom_call.1} parent=35 // pred_region
          %265 = dma.done [#allocation7], 2048
        $region48: #{tpu_custom_call.1} parent=35 // pred_fallthru
          _
        %s266 = sand.u32 %s44, 1
        %s267 = scalar_lea.sflag [#allocation4], %s266
        %s268 = sand.u32 %s44, 1
        %s269 = smul.addr %s268, 16
        %s270 = scalar_lea.vmem [#allocation3], %s269
        %p271 = pneg %p57
        %p272 = pneg %p54
        %s273 = sand.u32 %s22, 1
        %s274 = scalar_lea.sflag [#allocation7], %s273
        %s275 = sand.u32 %s70, 1
        %s276 = smul.addr %s275, 128
        %s277 = scalar_lea.vmem [#allocation6], %s276
        %p278 = pneg %p83
        %p279 = pneg %p80
        %p280 = pneg %p104
        %p281 = pneg %p101
        %p282 = pneg %p125
        %p283 = pneg %p122
        %p284 = pneg %p151
        %p285 = pneg %p148
        %s286 = smul.u32 2, %s26
        %s287 = smul.u32 2, %s27
        %s288 = smul.u32 32, %s27
        %s289 = smul.u32 2, %s26
        %p290 = scmp.eq.s32.totalorder %s27, 0
        // Predicated region
        $region49: #{tpu_custom_call.1} parent=35 // pred_check
          %p291 = pneg %p290
        $region50: #{tpu_custom_call.1} parent=35 // pred_check_branch
          %293 = sbr.rel (%p291) target = $region52
        $region51: #{tpu_custom_call.1} parent=35 // pred_region
          %294 = vst [vmem:[#allocation2] sm:$0xff] 0.0
          %295 = vst [vmem:[#allocation2 + $0x8] sm:$0xff] 0.0
        $region52: #{tpu_custom_call.1} parent=35 // pred_fallthru
          _
        %v296 = vld [vmem:[#allocation2] sm:$0xff]
        %v297 = vld [vmem:[#allocation2 + $0x8] sm:$0xff]
        %v298 = vld [vmem:[%s245] sm:$0xff]
        %v299 = vld [vmem:[%s245 + $0x8] sm:$0xff]
        %v300 = vld [vmem:[%s255] sm:$0xf]
        %v301 = vld [vmem:[%s255 + $0x4] sm:$0xf]
        %v302 = vld [vmem:[%s255 + $0x8] sm:$0xf]
        %v303 = vld [vmem:[%s255 + $0xc] sm:$0xf]
        %v304 = vld [vmem:[%s255 + $0x10] sm:$0xf]
        %v305 = vld [vmem:[%s255 + $0x14] sm:$0xf]
        %v306 = vld [vmem:[%s255 + $0x18] sm:$0xf]
        %v307 = vld [vmem:[%s255 + $0x1c] sm:$0xf]
        %v308 = vld [vmem:[%s255 + $0x20] sm:$0xf]
        %v309 = vld [vmem:[%s255 + $0x24] sm:$0xf]
        %v310 = vld [vmem:[%s255 + $0x28] sm:$0xf]
        %v311 = vld [vmem:[%s255 + $0x2c] sm:$0xf]
        %v312 = vld [vmem:[%s255 + $0x30] sm:$0xf]
        %v313 = vld [vmem:[%s255 + $0x34] sm:$0xf]
        %v314 = vld [vmem:[%s255 + $0x38] sm:$0xf]
        %v315 = vld [vmem:[%s255 + $0x3c] sm:$0xf]
        %v316 = vld [vmem:[%s255 + $0x40] sm:$0xf]
        %v317 = vld [vmem:[%s255 + $0x44] sm:$0xf]
        %v318 = vld [vmem:[%s255 + $0x48] sm:$0xf]
        %v319 = vld [vmem:[%s255 + $0x4c] sm:$0xf]
        %v320 = vld [vmem:[%s255 + $0x50] sm:$0xf]
        %v321 = vld [vmem:[%s255 + $0x54] sm:$0xf]
        %v322 = vld [vmem:[%s255 + $0x58] sm:$0xf]
        %v323 = vld [vmem:[%s255 + $0x5c] sm:$0xf]
        %v324 = vld [vmem:[%s255 + $0x60] sm:$0xf]
        %v325 = vld [vmem:[%s255 + $0x64] sm:$0xf]
        %v326 = vld [vmem:[%s255 + $0x68] sm:$0xf]
        %v327 = vld [vmem:[%s255 + $0x6c] sm:$0xf]
        %v328 = vld [vmem:[%s255 + $0x70] sm:$0xf]
        %v329 = vld [vmem:[%s255 + $0x74] sm:$0xf]
        %v330 = vld [vmem:[%s255 + $0x78] sm:$0xf]
        %v331 = vld [vmem:[%s255 + $0x7c] sm:$0xf]
        %v334 = vunpack.c.l.b16 %v298
        %v335 = vunpack.c.h.b16 %v298
        %v336 = vunpack.c.l.b16 %v299
        %v337 = vunpack.c.h.b16 %v299
        %v338 = vpack.c.b16 %v336, %v334
        %v339 = vpack.c.b16 %v337, %v335
        %v374 = vunpack.c.l.b16 %v300
        %v375 = vunpack.c.l.b16 %v301
        %v376 = vunpack.c.l.b16 %v302
        %v377 = vunpack.c.l.b16 %v303
        %v378 = vunpack.c.l.b16 %v304
        %v379 = vunpack.c.l.b16 %v305
        %v380 = vunpack.c.l.b16 %v306
        %v381 = vunpack.c.l.b16 %v307
        %v382 = vunpack.c.l.b16 %v308
        %v383 = vunpack.c.l.b16 %v309
        %v384 = vunpack.c.l.b16 %v310
        %v385 = vunpack.c.l.b16 %v311
        %v386 = vunpack.c.l.b16 %v312
        %v387 = vunpack.c.l.b16 %v313
        %v388 = vunpack.c.l.b16 %v314
        %v389 = vunpack.c.l.b16 %v315
        %v390 = vunpack.c.l.b16 %v316
        %v391 = vunpack.c.l.b16 %v317
        %v392 = vunpack.c.l.b16 %v318
        %v393 = vunpack.c.l.b16 %v319
        %v394 = vunpack.c.l.b16 %v320
        %v395 = vunpack.c.l.b16 %v321
        %v396 = vunpack.c.l.b16 %v322
        %v397 = vunpack.c.l.b16 %v323
        %v398 = vunpack.c.l.b16 %v324
        %v399 = vunpack.c.l.b16 %v325
        %v400 = vunpack.c.l.b16 %v326
        %v401 = vunpack.c.l.b16 %v327
        %v402 = vunpack.c.l.b16 %v328
        %v403 = vunpack.c.l.b16 %v329
        %v404 = vunpack.c.l.b16 %v330
        %v405 = vunpack.c.l.b16 %v331
        %v406 = vpack.c.b16 %v375, %v374
        %v407 = vpack.c.b16 %v377, %v376
        %v408 = vpack.c.b16 %v379, %v378
        %v409 = vpack.c.b16 %v381, %v380
        %v410 = vpack.c.b16 %v383, %v382
        %v411 = vpack.c.b16 %v385, %v384
        %v412 = vpack.c.b16 %v387, %v386
        %v413 = vpack.c.b16 %v389, %v388
        %v414 = vpack.c.b16 %v391, %v390
        %v415 = vpack.c.b16 %v393, %v392
        %v416 = vpack.c.b16 %v395, %v394
        %v417 = vpack.c.b16 %v397, %v396
        %v418 = vpack.c.b16 %v399, %v398
        %v419 = vpack.c.b16 %v401, %v400
        %v420 = vpack.c.b16 %v403, %v402
        %v421 = vpack.c.b16 %v405, %v404
        %438 = vmatpush.bf16.msra.mxu0 %v413
        %439 = vmatpush.bf16.msra.mxu0 %v412
        %440 = vmatpush.bf16.msra.mxu0 %v411
        %441 = vmatpush.bf16.msra.mxu0 %v410
        %442 = vmatpush.bf16.msra.mxu0 %v409
        %443 = vmatpush.bf16.msra.mxu0 %v408
        %444 = vmatpush.bf16.msra.mxu0 %v407
        %445 = vmatpush.bf16.msra.mxu0 %v406
        %446 = vmatmul.bf16.gmra.mxu0 %v338
        %v447 = vpop.f32.mrf.mxu0
        %v448 = vadd.f32 0.0, %v447
        %v449 = vpop.f32.mrf.mxu0
        %v450 = vadd.f32 0.0, %v449
        %451 = vdwg.mxu0
        %452 = vmatpush.bf16.msra.mxu0 %v421
        %453 = vmatpush.bf16.msra.mxu0 %v420
        %454 = vmatpush.bf16.msra.mxu0 %v419
        %455 = vmatpush.bf16.msra.mxu0 %v418
        %456 = vmatpush.bf16.msra.mxu0 %v417
        %457 = vmatpush.bf16.msra.mxu0 %v416
        %458 = vmatpush.bf16.msra.mxu0 %v415
        %459 = vmatpush.bf16.msra.mxu0 %v414
        %460 = vmatmul.bf16.gmra.mxu0 %v339
        %v461 = vpop.f32.mrf.mxu0
        %v462 = vadd.f32 %v448, %v461
        %v463 = vpop.f32.mrf.mxu0
        %v464 = vadd.f32 %v450, %v463
        %465 = vdwg.mxu0
        %v466 = vadd.f32 %v296, %v462
        %v467 = vadd.f32 %v297, %v464
        %468 = vst [vmem:[#allocation2] sm:$0xff] %v466
        %469 = vst [vmem:[#allocation2 + $0x8] sm:$0xff] %v467
        %p470 = scmp.eq.s32.totalorder %s27, 2
        // Predicated region
        $region53: #{tpu_custom_call.1} parent=35 // pred_check
          %p471 = pneg %p470
        $region54: #{tpu_custom_call.1} parent=35 // pred_check_branch
          %473 = sbr.rel (%p471) target = $region56
        $region55: #{tpu_custom_call.1} parent=35 // pred_region
          %v474 = vld [vmem:[#allocation2] sm:$0xff]
          %v475 = vld [vmem:[#allocation2 + $0x8] sm:$0xff]
          %v476 = vld [vmem:[%s2] sm:$0x1]
          %v478 = vperm.slane %v476, 0
          %v480 = vadd.f32 %v474, %v478
          %v481 = vadd.f32 %v475, %v478
          %v482 = vmul.f32 %v480, %v480
          %v483 = vmul.f32 %v481, %v481
          %484 = vadd.xlane.f32.xlu0 %v482
          %v485 = vpop.xlane.xlu0 %484
          %486 = vadd.xlane.f32.xlu0 %v483
          %v487 = vpop.xlane.xlu0 %486
          %v488 = vrsqrt.pop %v485
          %v489 = vmul.f32 %v488, %v485
          %v490 = vmul.f32 %v489, %v488
          %v491 = vmul.f32 0.5, %v490
          %v492 = vsub.f32 1.5, %v491
          %v493 = vmul.f32 %v488, %v492
          %vm494 = vweird.f32 %v485
          %vm495 = vweird.f32 %v488
          %vm496 = vmor %vm494, %vm495
          %v497 = vsel %vm496, %v488, %v493
          %v498 = vrsqrt.pop %v487
          %v499 = vmul.f32 %v498, %v487
          %v500 = vmul.f32 %v499, %v498
          %v501 = vmul.f32 0.5, %v500
          %v502 = vsub.f32 1.5, %v501
          %v503 = vmul.f32 %v498, %v502
          %vm504 = vweird.f32 %v487
          %vm505 = vweird.f32 %v498
          %vm506 = vmor %vm504, %vm505
          %v507 = vsel %vm506, %v498, %v503
          %v508 = vmul.f32 %v480, %v497
          %v509 = vmul.f32 %v481, %v507
          %v510 = vld [vmem:[#allocation8] sm:$0xff]
          %v511 = vld [vmem:[#allocation8 + $0x8] sm:$0xff]
          %v512 = vld [vmem:[#allocation8 + $0x10] sm:$0xff]
          %v513 = vld [vmem:[#allocation8 + $0x18] sm:$0xff]
          %v514 = vld [vmem:[#allocation8 + $0x20] sm:$0xff]
          %v515 = vld [vmem:[#allocation8 + $0x28] sm:$0xff]
          %v516 = vld [vmem:[#allocation8 + $0x30] sm:$0xff]
          %v517 = vld [vmem:[#allocation8 + $0x38] sm:$0xff]
          %v518 = vld [vmem:[#allocation8 + $0x40] sm:$0xff]
          %v519 = vld [vmem:[#allocation8 + $0x48] sm:$0xff]
          %v520 = vld [vmem:[#allocation8 + $0x50] sm:$0xff]
          %v521 = vld [vmem:[#allocation8 + $0x58] sm:$0xff]
          %v522 = vld [vmem:[#allocation8 + $0x60] sm:$0xff]
          %v523 = vld [vmem:[#allocation8 + $0x68] sm:$0xff]
          %v524 = vld [vmem:[#allocation8 + $0x70] sm:$0xff]
          %v525 = vld [vmem:[#allocation8 + $0x78] sm:$0xff]
          %526 = vmatpush.xpose.msra.mxu0 %v525
          %527 = vmatpush.xpose.msra.mxu0 %v524
          %528 = vmatpush.xpose.msra.mxu0 %v523
          %529 = vmatpush.xpose.msra.mxu0 %v522
          %530 = vmatpush.xpose.msra.mxu0 %v521
          %531 = vmatpush.xpose.msra.mxu0 %v520
          %532 = vmatpush.xpose.msra.mxu0 %v519
          %533 = vmatpush.xpose.msra.mxu0 %v518
          %534 = vmatpush.xpose.msra.mxu0 %v517
          %535 = vmatpush.xpose.msra.mxu0 %v516
          %536 = vmatpush.xpose.msra.mxu0 %v515
          %537 = vmatpush.xpose.msra.mxu0 %v514
          %538 = vmatpush.xpose.msra.mxu0 %v513
          %539 = vmatpush.xpose.msra.mxu0 %v512
          %540 = vmatpush.xpose.msra.mxu0 %v511
          %541 = vmatpush.xpose.msra.mxu0 %v510
          %542 = vmatmul.f32.gmra.mxu0 %v508
          %v543 = vpop.f32.mrf.mxu0
          %v544 = vadd.f32 0.0, %v543
          %545 = vmatmul.f32.gmra.mxu0 %v509
          %v546 = vpop.f32.mrf.mxu0
          %v547 = vadd.f32 0.0, %v546
          %548 = vdwg.mxu0
          %549 = vst [vmem:[#allocation9] sm:$0xff] %v544
          %550 = vst [vmem:[#allocation9 + $0x8] sm:$0xff] %v547
        $region56: #{tpu_custom_call.1} parent=35 // pred_fallthru
          _
        // Predicated region
        $region57: #{tpu_custom_call.1} parent=35 // pred_check
          %p551 = pneg %p148
        $region58: #{tpu_custom_call.1} parent=35 // pred_check_branch
          %553 = sbr.rel (%p551) target = $region60
        $region59: #{tpu_custom_call.1} parent=35 // pred_region
          %s554 = smul.u32 2, %s26
          %556 = vsyncadd [#allocation5], 0
          %s557 = smul.addr %s554, 8
          %s558 = scalar_lea.hbm %s4, %s557
          %s559 = sshll.u32 [#allocation9], 4
          %s560 = int_to_ptr.vmem [resolvable:$true] %s559
          %s561 = sshll.u32 %s558, 4
          %s562 = int_to_ptr.hbm [resolvable:$true] %s561
          %567 = dma.vmem_to_hbm [thread:$0]  %s560, 256, %s562, [#allocation5], 128, 128, 8
        $region60: #{tpu_custom_call.1} parent=35 // pred_fallthru
          _
        // Predicated region
        $region61: #{tpu_custom_call.1} parent=35 // pred_check
          %p568 = pneg %p148
        $region62: #{tpu_custom_call.1} parent=35 // pred_check_branch
          %570 = sbr.rel (%p568) target = $region64
        $region63: #{tpu_custom_call.1} parent=35 // pred_region
          %572 = dma.done [#allocation5], 256
        $region64: #{tpu_custom_call.1} parent=35 // pred_fallthru
          _
      $region36: #{tpu_custom_call.1} parent=5 // pred_fallthru
        _
      %p573 = scmp.le.s32.totalorder 2, %s17
      // Predicated region
      $region65: #{tpu_custom_call.1} parent=5 // pred_check
        %p574 = pneg %p573
      $region66: #{tpu_custom_call.1} parent=5 // pred_check_branch
        %576 = sbr.rel (%p574) target = $region68
      $region67: #{tpu_custom_call.1} parent=5 // pred_region
        %s577 = ssub.s32 %s17, 2
      $region68: #{tpu_custom_call.1} parent=5 // pred_fallthru
        _
    $region6: #{tpu_custom_call.1} parent=1 // loop_footer
      %s21 = sadd.s32 1, %s17
    $region7: #{tpu_custom_call.1} parent=1 // loop_footer_branch
      %16 = sbr.rel target = $region3
    $region8: #{tpu_custom_call.1} parent=1 // loop_exit
      _
    %578 = vsyncpa [#allocation4], 1
    %s579 = scalar_lea.sflag [#allocation4], 1
    %580 = vsyncpa %s579, 1
    %581 = vsyncpa [#allocation7], 1
    %s582 = scalar_lea.sflag [#allocation7], 1
    %583 = vsyncpa %s582, 1
    %584 = vsyncpa [#allocation5], 1
    %s585 = scalar_lea.sflag [#allocation5], 1
    %586 = vsyncpa %s585, 1

</llo_original>
